<compile_context>
chip_gen: v7x
topology: tpu7x:2x2x1
jax: 0.10.0
libtpu: 0.0.40
codegen_flags: <defaults>
</compile_context>

<pallas_src>
import functools

import jax
import jax.numpy as jnp
from jax import lax
from jax.experimental import pallas as pl
from jax.experimental.pallas import tpu as pltpu


def _ce_int_kernel(logits_ref, tgt_ref, out_ref, *, coef_true, coef_all):
    """Per-row loss for integer class targets; no one-hot materialized."""
    x = logits_ref[...].astype(jnp.float32)                 # (TILE_N, C)
    tgt = tgt_ref[...]                                      # (TILE_N, 1) int32

    # Numerically stable log_softmax along the class (lane) axis.
    m = jnp.max(x, axis=1, keepdims=True)                   # (TILE_N, 1)
    z = x - m
    lse = jnp.log(jnp.sum(jnp.exp(z), axis=1, keepdims=True))
    log_sm = z - lse                                        # (TILE_N, C)

    # Pick log_sm at the target class via an iota mask (no HBM one-hot).
    class_ids = lax.broadcasted_iota(jnp.int32, x.shape, 1)
    picked = jnp.sum(jnp.where(class_ids == tgt, log_sm, 0.0),
                     axis=1, keepdims=True)                 # (TILE_N, 1)

    if coef_all != 0.0:
        s_all = jnp.sum(log_sm, axis=1, keepdims=True)      # (TILE_N, 1)
        loss = -coef_true * picked - coef_all * s_all
    else:
        loss = -coef_true * picked

    # Output is (TILE_N, 1): output bytes are N*4 vs N*C*4 read, so the
    # narrow-lane store is negligible and avoids a sublane->lane relayout.
    out_ref[...] = loss.astype(out_ref.dtype)


def _ce_soft_kernel(logits_ref, tgt_ref, out_ref, *, coef_true, coef_all):
    """Per-row loss for soft (probability) targets; smoothing folded into scalars."""
    x = logits_ref[...].astype(jnp.float32)                 # (TILE_N, C)
    t = tgt_ref[...].astype(jnp.float32)                    # (TILE_N, C)

    m = jnp.max(x, axis=1, keepdims=True)
    z = x - m
    lse = jnp.log(jnp.sum(jnp.exp(z), axis=1, keepdims=True))
    log_sm = z - lse

    s1 = jnp.sum(t * log_sm, axis=1, keepdims=True)
    if coef_all != 0.0:
        s2 = jnp.sum(log_sm, axis=1, keepdims=True)
        loss = -coef_true * s1 - coef_all * s2
    else:
        loss = -coef_true * s1

    out_ref[...] = loss.astype(out_ref.dtype)


def _choose_tile_n(N, C, logits_itemsize, soft_targets):
    """Largest batch tile (multiple of 8) fitting a conservative VMEM budget.

    Budget covers the double-buffered input tiles and stays well inside the
    16 MiB default scoped VMEM on v5e and the 64 MiB physical VMEM on v7x.
    """
    budget = 8 * 1024 * 1024
    row_bytes = C * logits_itemsize                      # logits row
    row_bytes += C * logits_itemsize if soft_targets else 4
    row_bytes *= 2                                       # double buffering
    tile = budget // max(row_bytes, 1)
    tile = max(8, min(512, (tile // 8) * 8))
    # Don't pad tiny batches beyond the next sublane multiple.
    n_up = ((N + 7) // 8) * 8
    return min(tile, max(n_up, 8))


def smooth_cross_entropy_loss(inputs, targets, eps=0.0):
    """Pallas implementation of SmoothCrossEntropyLoss.forward.

    inputs:  (N, C) float logits (f32 or bf16)
    targets: (N,) int class indices OR (N, C) soft labels
    returns: (N,) per-sample loss (no batch reduction, matching the module)
    """
    N, C = inputs.shape

    # Fold smoothing into two compile-time scalars.
    # Guard C == 1 (PyTorch's eps/(C-1) would divide by zero there).
    if eps > 0 and C > 1:
        coef_all = float(eps) / (C - 1)
        coef_true = (1.0 - float(eps)) - coef_all
    else:
        coef_all = 0.0
        coef_true = 1.0

    int_targets = targets.ndim == 1
    tile_n = _choose_tile_n(N, C, jnp.dtype(inputs.dtype).itemsize,
                            soft_targets=not int_targets)
    num_tiles = pl.cdiv(N, tile_n)
    n_pad = num_tiles * tile_n

    logits = inputs
    if n_pad != N:
        logits = jnp.pad(logits, ((0, n_pad - N), (0, 0)))

    if int_targets:
        tgt = targets.astype(jnp.int32).reshape(N, 1)
        if n_pad != N:
            tgt = jnp.pad(tgt, ((0, n_pad - N), (0, 0)))
        kernel = functools.partial(_ce_int_kernel,
                                   coef_true=coef_true, coef_all=coef_all)
        tgt_spec = pl.BlockSpec((tile_n, 1), lambda i: (i, 0))
    else:
        tgt = targets
        if n_pad != N:
            tgt = jnp.pad(tgt, ((0, n_pad - N), (0, 0)))
        kernel = functools.partial(_ce_soft_kernel,
                                   coef_true=coef_true, coef_all=coef_all)
        tgt_spec = pl.BlockSpec((tile_n, C), lambda i: (i, 0))

    out = pl.pallas_call(
        kernel,
        out_shape=jax.ShapeDtypeStruct((n_pad, 1), jnp.float32),
        grid=(num_tiles,),
        in_specs=[
            pl.BlockSpec((tile_n, C), lambda i: (i, 0)),
            tgt_spec,
        ],
        out_specs=pl.BlockSpec((tile_n, 1), lambda i: (i, 0)),
        compiler_params=pltpu.CompilerParams(
            dimension_semantics=("parallel",),
        ),
    )(logits, tgt)

    return out[:N, 0].astype(inputs.dtype)


def _reference(inputs, targets, eps=0.0):
    """Pure-JAX reference mirroring the PyTorch module exactly."""
    if targets.ndim == 1:
        targets = jax.nn.one_hot(targets.astype(jnp.int32), inputs.shape[1],
                                 dtype=inputs.dtype)
    if eps > 0:
        n_class = inputs.shape[1]
        targets = targets * (1 - eps) + (1 - targets) * eps / (n_class - 1)
    log_sm = jax.nn.log_softmax(inputs, axis=1)
    return jnp.sum(-targets * log_sm, axis=-1)


if __name__ == "__main__":
    key = jax.random.PRNGKey(0)
    k1, k2 = jax.random.split(key)

    N, C = 10, 32   # non-multiple-of-8 batch exercises the padding path
    eps = 0.1

    logits = jax.random.normal(k1, (N, C), dtype=jnp.float32)
    targets_int = jax.random.randint(k2, (N,), 0, C, dtype=jnp.int32)

    # Case 1: integer class targets (no one-hot ever materialized).
    loss_int = smooth_cross_entropy_loss(logits, targets_int, eps=eps)
    jax.block_until_ready(loss_int)
    ref_int = _reference(logits, targets_int, eps=eps)

    # Case 2: soft (probability) targets.
    soft_targets = jax.nn.one_hot(targets_int, C, dtype=jnp.float32)
    loss_soft = smooth_cross_entropy_loss(logits, soft_targets, eps=eps)
    jax.block_until_ready(loss_soft)
    ref_soft = _reference(logits, soft_targets, eps=eps)

    # Case 3: eps = 0 (plain cross entropy) on the int path.
    loss_noeps = smooth_cross_entropy_loss(logits, targets_int, eps=0.0)
    jax.block_until_ready(loss_noeps)
    ref_noeps = _reference(logits, targets_int, eps=0.0)

    assert loss_int.shape == (N,)
    assert jnp.allclose(loss_int, ref_int, atol=1e-5, rtol=1e-5)
    assert jnp.allclose(loss_soft, ref_soft, atol=1e-5, rtol=1e-5)
    assert jnp.allclose(loss_noeps, ref_noeps, atol=1e-5, rtol=1e-5)

    print("KERNEL_OK")
</pallas_src>

<mosaic_0001>
module attributes {stable_mosaic.version = 11 : i64} {
  func.func @_ce_int_kernel(%arg0: i32, %arg1: memref<16x32xf32, #tpu.memory_space<vmem>>, %arg2: memref<16x1xi32, #tpu.memory_space<vmem>>, %arg3: memref<16x1xf32, #tpu.memory_space<vmem>>) attributes {dimension_semantics = [#tpu.dimension_semantics<parallel>], iteration_bounds = array<i64: 1>, scalar_prefetch = 0 : i64, scratch_operands = 0 : i64, tpu.core_type = #tpu.core_type<tc>, window_params = [{transform_indices = @transform_0, window_bounds = array<i64: 16, 32>}, {transform_indices = @transform_1, window_bounds = array<i64: 16, 1>}, {transform_indices = @transform_2, window_bounds = array<i64: 16, 1>}]} {
    %c0 = arith.constant 0 : index
    %c0_0 = arith.constant 0 : index
    %0 = vector.load %arg1[%c0, %c0_0] : memref<16x32xf32, #tpu.memory_space<vmem>>, vector<16x32xf32>
    %c0_1 = arith.constant 0 : index
    %c0_2 = arith.constant 0 : index
    %1 = vector.load %arg2[%c0_1, %c0_2] : memref<16x1xi32, #tpu.memory_space<vmem>>, vector<16x1xi32>
    %cst = arith.constant dense<0xFF800000> : vector<16xf32>
    %2 = vector.multi_reduction <maximumf>, %0, %cst [1] : vector<16x32xf32> to vector<16xf32>
    %3 = vector.shape_cast %2 : vector<16xf32> to vector<16x1xf32>
    %4 = vector.broadcast %3 : vector<16x1xf32> to vector<16x32xf32>
    %5 = arith.subf %0, %4 : vector<16x32xf32>
    %6 = math.exp %5 : vector<16x32xf32>
    %cst_3 = arith.constant dense<0.000000e+00> : vector<16xf32>
    %7 = vector.multi_reduction <add>, %6, %cst_3 [1] : vector<16x32xf32> to vector<16xf32>
    %8 = vector.shape_cast %7 : vector<16xf32> to vector<16x1xf32>
    %9 = math.log %8 : vector<16x1xf32>
    %10 = vector.broadcast %9 : vector<16x1xf32> to vector<16x32xf32>
    %11 = arith.subf %5, %10 : vector<16x32xf32>
    %12 = tpu.iota {dimensions = array<i32: 1>} : vector<16x32xi32>
    %13 = vector.broadcast %1 : vector<16x1xi32> to vector<16x32xi32>
    %14 = arith.cmpi eq, %12, %13 : vector<16x32xi32>
    %cst_4 = arith.constant 0.000000e+00 : f32
    %15 = vector.broadcast %cst_4 : f32 to vector<16x32xf32>
    %16 = arith.select %14, %11, %15 : vector<16x32xi1>, vector<16x32xf32>
    %cst_5 = arith.constant dense<0.000000e+00> : vector<16xf32>
    %17 = vector.multi_reduction <add>, %16, %cst_5 [1] : vector<16x32xf32> to vector<16xf32>
    %18 = vector.shape_cast %17 : vector<16xf32> to vector<16x1xf32>
    %cst_6 = arith.constant dense<0.000000e+00> : vector<16xf32>
    %19 = vector.multi_reduction <add>, %11, %cst_6 [1] : vector<16x32xf32> to vector<16xf32>
    %20 = vector.shape_cast %19 : vector<16xf32> to vector<16x1xf32>
    %cst_7 = arith.constant -0.896774172 : f32
    %21 = vector.broadcast %cst_7 : f32 to vector<16x1xf32>
    %22 = arith.mulf %21, %18 : vector<16x1xf32>
    %cst_8 = arith.constant 0.0032258064 : f32
    %23 = vector.broadcast %cst_8 : f32 to vector<16x1xf32>
    %24 = arith.mulf %23, %20 : vector<16x1xf32>
    %25 = arith.subf %22, %24 : vector<16x1xf32>
    %c0_9 = arith.constant 0 : index
    %c0_10 = arith.constant 0 : index
    %26 = vector.load %arg3[%c0_9, %c0_10] : memref<16x1xf32, #tpu.memory_space<vmem>>, vector<16x1xf32>
    tpu.vector_store %arg3[%c0_9, %c0_10], %25 {strides = array<i32>} : memref<16x1xf32, #tpu.memory_space<vmem>>, vector<16x1xf32>,
    return
  }
  func.func @transform_0(%arg0: i32) -> (i32, i32) {
    %c0_i32 = arith.constant 0 : i32
    %c0_i32_0 = arith.constant 0 : i32
    return %arg0, %c0_i32 : i32, i32
  }
  func.func @transform_1(%arg0: i32) -> (i32, i32) {
    %c0_i32 = arith.constant 0 : i32
    %c0_i32_0 = arith.constant 0 : i32
    return %arg0, %c0_i32 : i32, i32
  }
  func.func @transform_2(%arg0: i32) -> (i32, i32) {
    %c0_i32 = arith.constant 0 : i32
    %c0_i32_0 = arith.constant 0 : i32
    return %arg0, %c0_i32 : i32, i32
  }
}

</mosaic_0001>

<llo_original>
// kernel: tpu_custom_call.1
$region0: #{tpu_custom_call.1}
  #allocation0 [shape = 'u32[]', space=smem, size = 0x4, offset = 0x4, fixed_abs, tag = 'smem constant byte address 0x4 - core index']
  #allocation1 [shape = 'u32[144,128]{1,0:T(1,128)}', space=vmem, size = 0x12000, scoped, tag = 'internal scratch']
  %s0 = inlined_call_operand.vmem [shape: f32[16,32], index: 0, kind: input, shape index: {}]
  %s1 = inlined_call_operand.vmem [shape: s32[16,1], index: 1, kind: input, shape index: {}]
  %s2 = inlined_call_operand.vmem [shape: f32[16,1], index: 2, kind: output, shape index: {}]
  %s3 = sld [smem:[#allocation0]]
  $region18: #{tpu_custom_call.1} parent=0
    _
  %s5 = ssub.s32 1, %s3
  %s6 = scalar_select 0, %s5, %s3
  // Predicated region
  $region2: #{tpu_custom_call.1} parent=0 // pred_check
    _
  $region3: #{tpu_custom_call.1} parent=0 // pred_check_branch
    %8 = sbr.rel (0) target = $region5
  $region4: #{tpu_custom_call.1} parent=0 // pred_region
    _
  $region5: #{tpu_custom_call.1} parent=0 // pred_fallthru
    _
  // Predicated region
  $region6: #{tpu_custom_call.1} parent=0 // pred_check
    _
  $region7: #{tpu_custom_call.1} parent=0 // pred_check_branch
    %10 = sbr.rel (0) target = $region9
  $region8: #{tpu_custom_call.1} parent=0 // pred_region
    _
  $region9: #{tpu_custom_call.1} parent=0 // pred_fallthru
    _
  %v11 = vld [vmem:[%s0] sm:$0xff]
  %v12 = vld [vmem:[%s0 + $0x8] sm:$0xff]
  %v13 = vld [vmem:[%s1] sm:$0xff]
  %v14 = vld [vmem:[%s1 + $0x8] sm:$0xff]
  %vm15 = vcmask 261120
  %v16 = vsel %vm15, %v11, -inf
  %17 = vmax.xlane.f32.xlu0 %v16
  %v18 = vpop.xlane.xlu0 %17
  %v19 = vsel %vm15, %v12, -inf
  %20 = vmax.xlane.f32.xlu0 %v19
  %v21 = vpop.xlane.xlu0 %20
  %v22 = vsub.f32 %v11, %v18
  %v23 = vsub.f32 %v12, %v21
  %v24 = vmul.f32 %v22, 1.442695
  %v25 = vpow.pop %v24
  %v26 = vmul.f32 %v23, 1.442695
  %v27 = vpow.pop %v26
  %v28 = vsel %vm15, %v25, 0.0
  %29 = vadd.xlane.f32.xlu0 %v28
  %v30 = vpop.xlane.xlu0 %29
  %v31 = vsel %vm15, %v27, 0.0
  %32 = vadd.xlane.f32.xlu0 %v31
  %v33 = vpop.xlane.xlu0 %32
  %v34 = vlog2.pop %v30
  %v35 = vmul.f32 %v34, 0.6931472
  %v36 = vlog2.pop %v33
  %v37 = vmul.f32 %v36, 0.6931472
  %v38 = vsub.f32 %v22, %v35
  %v39 = vsub.f32 %v23, %v37
  %v40 = vlaneseq
  %v41 = vand.u32 %v40, 127
  %42 = vset.pattern.permute.xlu0 0
  %43 = vperm.xlu0 %42, %v13
  %v44 = vpop.permute.xlu0 %43
  %45 = vset.pattern.permute.xlu0 0
  %46 = vperm.xlu0 %45, %v14
  %v47 = vpop.permute.xlu0 %46
  %vm48 = vcmp.eq.s32.totalorder %v41, %v44
  %vm49 = vcmp.eq.s32.totalorder %v41, %v47
  %v50 = vsel %vm48, %v38, 0.0
  %v51 = vsel %vm49, %v39, 0.0
  %v52 = vsel %vm15, %v50, 0.0
  %53 = vadd.xlane.f32.xlu0 %v52
  %v54 = vpop.xlane.xlu0 %53
  %v55 = vsel %vm15, %v51, 0.0
  %56 = vadd.xlane.f32.xlu0 %v55
  %v57 = vpop.xlane.xlu0 %56
  %v58 = vsel %vm15, %v38, 0.0
  %59 = vadd.xlane.f32.xlu0 %v58
  %v60 = vpop.xlane.xlu0 %59
  %v61 = vsel %vm15, %v39, 0.0
  %62 = vadd.xlane.f32.xlu0 %v61
  %v63 = vpop.xlane.xlu0 %62
  %v64 = vmul.f32 %v54, -0.8967742
  %v65 = vmul.f32 %v57, -0.8967742
  %v66 = vmul.f32 %v60, 0.0032258064
  %v67 = vmul.f32 %v63, 0.0032258064
  %v68 = vsub.f32 %v64, %v66
  %v69 = vsub.f32 %v65, %v67
  %vm70 = vcmask 7168
  %71 = vst.msk [vmem:[%s2] sm:$0xff] %vm70, %v68
  %72 = vst.msk [vmem:[%s2 + $0x8] sm:$0xff] %vm70, %v69
  // Predicated region
  $region10: #{tpu_custom_call.1} parent=0 // pred_check
    _
  $region11: #{tpu_custom_call.1} parent=0 // pred_check_branch
    %74 = sbr.rel (0) target = $region13
  $region12: #{tpu_custom_call.1} parent=0 // pred_region
    _
  $region13: #{tpu_custom_call.1} parent=0 // pred_fallthru
    _
  // Predicated region
  $region14: #{tpu_custom_call.1} parent=0 // pred_check
    _
  $region15: #{tpu_custom_call.1} parent=0 // pred_check_branch
    %76 = sbr.rel (0) target = $region17
  $region16: #{tpu_custom_call.1} parent=0 // pred_region
    _
  $region17: #{tpu_custom_call.1} parent=0 // pred_fallthru
    _

</llo_original>
